<compile_context>
chip_gen: v5e
topology: v5e:2x2
jax: 0.10.0
libtpu: 0.0.40
codegen_flags: <defaults>
</compile_context>

<pallas_src>
import functools
import math

import jax
import jax.numpy as jnp
from jax.experimental import pallas as pl
from jax.experimental.pallas import tpu as pltpu


def _round_up(x, m):
    return ((x + m - 1) // m) * m


def _cdiv(a, b):
    return (a + b - 1) // b


@functools.lru_cache(maxsize=1)
def _tpu_config():
    """Returns (vmem_budget_bytes, vmem_limit_cap_bytes, bf16_eup_ok)."""
    vmem_phys = None
    try:
        vmem_phys = int(pltpu.get_tpu_info().vmem_capacity_bytes)
    except Exception:
        vmem_phys = None
    kind = ""
    try:
        kind = jax.devices()[0].device_kind.lower()
    except Exception:
        pass
    if vmem_phys is None:
        if ("v7" in kind) or ("7x" in kind):
            vmem_phys = 64 << 20
        elif any(g in kind for g in ("v4", "v5", "v6")):
            vmem_phys = 128 << 20
        else:
            vmem_phys = 64 << 20  # conservative default
    if vmem_phys >= (120 << 20):        # v4/v5e/v6e: 128 MiB per core
        budget, cap = 96 << 20, 110 << 20
    elif vmem_phys >= (60 << 20):       # v7x: 64 MiB per TC, leave headroom
        budget, cap = 40 << 20, 56 << 20
    else:                               # older / unknown small-VMEM parts
        budget = max(4 << 20, int(vmem_phys * 0.6))
        cap = max(budget, int(vmem_phys * 0.85))
    # bf16 EUP (tanh) exists on v6e/v7x; keep f32 tanh elsewhere (v5e has no bf16 EUP).
    bf16_eup = any(g in kind for g in ("v6", "v7", "7x"))
    return budget, cap, bf16_eup


def _fc_kernel_single_k(x_ref, w_ref, o_ref, *, act_dtype, compute_dtype):
    """Common path: whole K in one block. No accumulator scratch needed.

    x_ref: (TM, K)   input tile (original dtype)
    w_ref: (K, TN)   weight tile, already transposed + cast in the wrapper
    o_ref: (TM, TN)  output tile
    """
    x_act = jnp.tanh(x_ref[...].astype(act_dtype)).astype(compute_dtype)
    o_ref[...] = jnp.dot(
        x_act, w_ref[...], preferred_element_type=jnp.float32
    ).astype(o_ref.dtype)


def _fc_kernel_multi_k(x_ref, w_ref, o_ref, acc_ref, *, act_dtype, compute_dtype):
    """Fallback path: K split across grid axis 2 with an f32 VMEM accumulator."""
    kk = pl.program_id(2)

    @pl.when(kk == 0)
    def _():
        acc_ref[...] = jnp.zeros_like(acc_ref)

    x_act = jnp.tanh(x_ref[...].astype(act_dtype)).astype(compute_dtype)
    acc_ref[...] += jnp.dot(x_act, w_ref[...], preferred_element_type=jnp.float32)

    @pl.when(kk == pl.num_programs(2) - 1)
    def _():
        o_ref[...] = acc_ref[...].astype(o_ref.dtype)


@functools.partial(jax.jit, static_argnames=("use_bf16_matmul",))
def fully_connected_entity_layer(x, weight, *, use_bf16_matmul=True):
    """x: [..., K], weight: [N, K] (PyTorch Linear layout). Returns [..., N]."""
    *lead, k = x.shape
    n = weight.shape[0]
    m = math.prod(lead) if lead else 1
    x2d = x.reshape(m, k)

    budget, vmem_cap, bf16_eup = _tpu_config()

    compute_dtype = jnp.bfloat16 if use_bf16_matmul else jnp.float32
    act_dtype = jnp.bfloat16 if (use_bf16_matmul and bf16_eup) else jnp.float32

    x_bytes = jnp.dtype(x.dtype).itemsize
    w_bytes = jnp.dtype(compute_dtype).itemsize
    o_bytes = jnp.dtype(x.dtype).itemsize

    # ---- N / K tiling: keep the weight VMEM-resident whenever it fits ----
    n_pad128 = _round_up(n, 128)  # lane-dense (unmasked) output stores
    if 2 * k * n_pad128 * w_bytes <= budget // 3:
        num_n, tn = 1, n_pad128   # whole weight resident for the entire grid
        num_k, tk = 1, k
    else:
        num_n = max(1, _cdiv(n_pad128, 1024))
        tn = _round_up(_cdiv(n_pad128, num_n), 128)
        if 2 * k * tn * w_bytes <= budget // 3:
            num_k, tk = 1, k      # per-N-tile weight slab resident
        else:
            tk_target = 1024 if budget >= (64 << 20) else 512
            num_k = max(1, _cdiv(k, tk_target))
            tk = _round_up(_cdiv(k, num_k), 128)
    n_pad = num_n * tn
    k_pad = num_k * tk            # == k when num_k == 1

    def vmem_for(tm_):
        v = 2 * tm_ * tk * x_bytes        # double-buffered x tiles
        v += 2 * tk * tn * w_bytes        # weight buffers
        v += 2 * tm_ * tn * o_bytes       # double-buffered output tiles
        if num_k > 1:
            v += tm_ * tn * 4             # f32 accumulator scratch
        return v

    # ---- M tiling: balanced tiles, ragged last block (no M padding copy) ----
    if m <= 8:
        tm, num_m = m, 1
    else:
        num_m = max(1, _cdiv(m, 1024))
        if num_n == 1 and num_m < 2 and m >= 16:
            num_m = 2                     # >= 2 parallel tiles so v7x's 2 TCs both work
        tm = _round_up(_cdiv(m, num_m), 8)
        while vmem_for(tm) > budget and tm > 8:
            tm = max(8, _round_up(tm // 2, 8))
        if tm >= m:
            tm, num_m = m, 1
        else:
            num_m = _cdiv(m, tm)

    # K zero-padding of x only on the (rare) split-K path; zeros -> tanh(0)=0 -> no effect.
    if k_pad != k:
        x2d = jnp.pad(x2d, ((0, 0), (0, k_pad - k)))

    # One-time weight prep (fuses under jit, O(N*K)): transpose to [K, N] so the MXU
    # consumes a standard ((1,),(0,)) contraction with no per-tile relayout, cast to
    # the MXU operand dtype once, zero-pad K / N.
    w_t = weight.T.astype(compute_dtype)
    if (k_pad, n_pad) != (k, n):
        w_t = jnp.pad(w_t, ((0, k_pad - k), (0, n_pad - n)))

    if num_k == 1:
        kernel = functools.partial(
            _fc_kernel_single_k, act_dtype=act_dtype, compute_dtype=compute_dtype)
        scratch = []
    else:
        kernel = functools.partial(
            _fc_kernel_multi_k, act_dtype=act_dtype, compute_dtype=compute_dtype)
        scratch = [pltpu.VMEM((tm, tn), jnp.float32)]

    vmem_limit = int(min(vmem_cap, vmem_for(tm) + (8 << 20)))

    out2d = pl.pallas_call(
        kernel,
        out_shape=jax.ShapeDtypeStruct((m, n_pad), x.dtype),
        grid_spec=pltpu.PrefetchScalarGridSpec(
            num_scalar_prefetch=0,
            grid=(num_m, num_n, num_k),
            in_specs=[
                pl.BlockSpec((tm, tk), lambda i, j, kk: (i, kk)),
                pl.BlockSpec((tk, tn), lambda i, j, kk: (kk, j)),
            ],
            out_specs=pl.BlockSpec((tm, tn), lambda i, j, kk: (i, j)),
            scratch_shapes=scratch,
        ),
        compiler_params=pltpu.CompilerParams(
            dimension_semantics=("parallel", "parallel", "arbitrary"),
            vmem_limit_bytes=vmem_limit,
        ),
    )(x2d, w_t)

    out2d = out2d[:, :n]
    return out2d.reshape(*lead, n)


def xavier_uniform(key, out_dim, in_dim, dtype=jnp.float32):
    # Matches torch.nn.init.xavier_uniform_ with gain=1.
    bound = (6.0 / (in_dim + out_dim)) ** 0.5
    return jax.random.uniform(
        key, (out_dim, in_dim), dtype=dtype, minval=-bound, maxval=bound
    )


def reference(x, weight):
    return jnp.tanh(x) @ weight.T


if __name__ == "__main__":
    key = jax.random.PRNGKey(0)
    k_x, k_w = jax.random.split(key)

    batch, seq, input_dim, output_dim = 2, 8, 32, 64
    x = jax.random.normal(k_x, (batch, seq, input_dim), dtype=jnp.float32)
    weight = xavier_uniform(k_w, output_dim, input_dim)  # [out, in] (PyTorch layout)

    ref = reference(x, weight)

    # Default path: bf16 MXU operands with f32 accumulation (native MXU rate).
    out = fully_connected_entity_layer(x, weight)
    out = jax.block_until_ready(out)
    assert out.shape == (batch, seq, output_dim), out.shape
    assert jnp.allclose(out, ref, atol=5e-2, rtol=5e-2), "mismatch vs reference (bf16)"

    # Full-f32 operand path: matches the f32 reference tightly.
    out_f32 = fully_connected_entity_layer(x, weight, use_bf16_matmul=False)
    out_f32 = jax.block_until_ready(out_f32)
    assert jnp.allclose(out_f32, ref, atol=1e-5, rtol=1e-5), "mismatch vs reference (f32)"

    print("KERNEL_OK")
</pallas_src>

<mosaic_0001>
module attributes {stable_mosaic.version = 11 : i64} {
  func.func @_fc_kernel_single_k(%arg0: i32, %arg1: i32, %arg2: i32, %arg3: memref<8x32xf32, #tpu.memory_space<vmem>>, %arg4: memref<32x128xbf16, #tpu.memory_space<vmem>>, %arg5: memref<8x128xf32, #tpu.memory_space<vmem>>) attributes {dimension_semantics = [#tpu.dimension_semantics<parallel>, #tpu.dimension_semantics<parallel>, #tpu.dimension_semantics<arbitrary>], iteration_bounds = array<i64: 2, 1, 1>, scalar_prefetch = 0 : i64, scratch_operands = 0 : i64, tpu.core_type = #tpu.core_type<tc>, window_params = [{transform_indices = @transform_0, window_bounds = array<i64: 8, 32>}, {transform_indices = @transform_1, window_bounds = array<i64: 32, 128>}, {transform_indices = @transform_2, window_bounds = array<i64: 8, 128>}]} {
    %c0 = arith.constant 0 : index
    %c0_0 = arith.constant 0 : index
    %0 = vector.load %arg3[%c0, %c0_0] : memref<8x32xf32, #tpu.memory_space<vmem>>, vector<8x32xf32>
    %1 = math.tanh %0 : vector<8x32xf32>
    %2 = arith.truncf %1 : vector<8x32xf32> to vector<8x32xbf16>
    %c0_1 = arith.constant 0 : index
    %c0_2 = arith.constant 0 : index
    %3 = vector.load %arg4[%c0_1, %c0_2] : memref<32x128xbf16, #tpu.memory_space<vmem>>, vector<32x128xbf16>
    %cst = arith.constant dense<0.000000e+00> : vector<8x128xf32>
    %4 = tpu.matmul %2, %3, %cst {dimension_numbers = #tpu.dot_dimension_numbers<[1], [0], [0], [1], [0, 0, 1, 1], [], []>} : vector<8x32xbf16>, vector<32x128xbf16>, vector<8x128xf32> -> vector<8x128xf32>
    %c0_3 = arith.constant 0 : index
    %c0_4 = arith.constant 0 : index
    %5 = vector.load %arg5[%c0_3, %c0_4] : memref<8x128xf32, #tpu.memory_space<vmem>>, vector<8x128xf32>
    tpu.vector_store %arg5[%c0_3, %c0_4], %4 {strides = array<i32>} : memref<8x128xf32, #tpu.memory_space<vmem>>, vector<8x128xf32>,
    return
  }
  func.func @transform_0(%arg0: i32, %arg1: i32, %arg2: i32) -> (i32, i32) {
    %c0_i32 = arith.constant 0 : i32
    return %arg0, %arg2 : i32, i32
  }
  func.func @transform_1(%arg0: i32, %arg1: i32, %arg2: i32) -> (i32, i32) {
    %c0_i32 = arith.constant 0 : i32
    return %arg2, %arg1 : i32, i32
  }
  func.func @transform_2(%arg0: i32, %arg1: i32, %arg2: i32) -> (i32, i32) {
    %c0_i32 = arith.constant 0 : i32
    return %arg0, %arg1 : i32, i32
  }
}

</mosaic_0001>

<llo_original>
// kernel: fully_connected_entity_layer.1
$region0: #{fully_connected_entity_layer.1}
  #allocation0 [shape = 'u32[]', space=smem, size = 0x4, offset = 0x4, fixed_abs, tag = 'smem constant byte address 0x4 - core index']
  #allocation1 [shape = 'u32[72,128]{1,0:T(1,128)}', space=vmem, size = 0x9000, scoped, tag = 'internal scratch']
  %s0 = inlined_call_operand.vmem [shape: f32[16,32], index: 0, kind: input, shape index: {}]
  %s1 = inlined_call_operand.vmem [shape: bf16[32,128], index: 1, kind: input, shape index: {}]
  %s2 = inlined_call_operand.vmem [shape: f32[16,128], index: 2, kind: output, shape index: {}]
  %s3 = sld [smem:[#allocation0]]
  $region41: #{fully_connected_entity_layer.1} parent=0
    _
  %s5 = ssub.s32 1, %s3
  %s6 = scalar_select 0, %s5, %s3
  loop: start=0, step=1, limit=4
  $region2: #{fully_connected_entity_layer.1} parent=0 // loop_pre_header
    _
  $region3: #{fully_connected_entity_layer.1} parent=0 // loop_header
    %s8 = sphi 0, %s12
    %p9 = scmp.ge.s32.totalorder %s8, 4
    %s15 = sphi 0, %s34
    %s16 = sphi 0, %s30
    %s17 = sphi 0, %s26
    %s18 = sphi 0, %s15
    %s19 = sphi 0, %s16
    %s20 = sphi 0, %s17
    %s21 = sphi 0, %s18
    %s22 = sphi 0, %s19
    %s23 = sphi 0, %s20
    %s39 = sphi 0, %s41
    %s42 = sphi 0, %s39
    %s43 = sphi 0, %s42
    %s59 = sphi 0, %s43
    %s67 = sphi 0, %s69
    %s70 = sphi 0, %s67
    %s71 = sphi 0, %s70
    %s87 = sphi 0, %s71
    %s95 = sphi 0, %s97
    %s98 = sphi 0, %s95
    %s99 = sphi 0, %s98
    %s115 = sphi 0, %s99
  $region4: #{fully_connected_entity_layer.1} parent=0 // loop_header_branch
    %11 = sbr.rel (%p9) target = $region8
  $region5: #{fully_connected_entity_layer.1} parent=0 // loop_body
    %s13 = ssub.s32 %s8, 1
    %s14 = ssub.s32 %s8, 2
    %s24 = sadd.s32 1, %s17
    %p25 = scmp.ge.s32.totalorder %s24, 1
    %s26 = scalar_select %p25, 0, %s24
    %s27 = sadd.s32 1, %s16
    %s28 = scalar_select %p25, %s27, %s16
    %p29 = scmp.ge.s32.totalorder %s28, 1
    %s30 = scalar_select %p29, 0, %s28
    %s31 = sadd.s32 1, %s15
    %s32 = scalar_select %p29, %s31, %s15
    %p33 = scmp.ge.s32.totalorder %s32, 2
    %s34 = scalar_select %p33, 0, %s32
    %s35 = ssub.s32 %s15, %s34
    %s36 = ssub.s32 %s17, %s26
    %s37 = sor.u32 %s35, %s36
    %p38 = scmp.eq.s32.totalorder %s37, 0
    %s40 = sadd.s32 %s39, 1
    %s41 = scalar_select %p38, %s39, %s40
    %p44 = pneg %p38
    %p45 = scmp.eq.s32.totalorder %s8, 1
    %p46 = por %p44, %p45
    %p47 = scmp.ne.s32.totalorder %s39, %s42
    %p48 = scmp.eq.s32.totalorder %s8, 0
    %p49 = por %p47, %p48
    %p50 = scmp.ne.s32.totalorder %s39, %s42
    %p51 = scmp.eq.s32.totalorder %s13, 1
    %p52 = por %p50, %p51
    %p53 = scmp.ne.s32.totalorder %s42, %s43
    %p54 = scmp.eq.s32.totalorder %s13, 0
    %p55 = por %p53, %p54
    %p56 = scmp.ne.s32.totalorder %s42, %s43
    %p57 = scmp.eq.s32.totalorder %s14, 1
    %p58 = por %p56, %p57
    %p60 = scmp.ne.s32.totalorder %s43, %s59
    %p61 = scmp.eq.s32.totalorder %s14, 0
    %p62 = por %p60, %p61
    %s63 = ssub.s32 %s17, %s26
    %s64 = ssub.s32 %s16, %s30
    %s65 = sor.u32 %s63, %s64
    %p66 = scmp.eq.s32.totalorder %s65, 0
    %s68 = sadd.s32 %s67, 1
    %s69 = scalar_select %p66, %s67, %s68
    %p72 = pneg %p66
    %p73 = scmp.eq.s32.totalorder %s8, 1
    %p74 = por %p72, %p73
    %p75 = scmp.ne.s32.totalorder %s67, %s70
    %p76 = scmp.eq.s32.totalorder %s8, 0
    %p77 = por %p75, %p76
    %p78 = scmp.ne.s32.totalorder %s67, %s70
    %p79 = scmp.eq.s32.totalorder %s13, 1
    %p80 = por %p78, %p79
    %p81 = scmp.ne.s32.totalorder %s70, %s71
    %p82 = scmp.eq.s32.totalorder %s13, 0
    %p83 = por %p81, %p82
    %p84 = scmp.ne.s32.totalorder %s70, %s71
    %p85 = scmp.eq.s32.totalorder %s14, 1
    %p86 = por %p84, %p85
    %p88 = scmp.ne.s32.totalorder %s71, %s87
    %p89 = scmp.eq.s32.totalorder %s14, 0
    %p90 = por %p88, %p89
    %s91 = ssub.s32 %s15, %s34
    %s92 = ssub.s32 %s16, %s30
    %s93 = sor.u32 %s91, %s92
    %p94 = scmp.eq.s32.totalorder %s93, 0
    %s96 = sadd.s32 %s95, 1
    %s97 = scalar_select %p94, %s95, %s96
    %p100 = pneg %p94
    %p101 = scmp.eq.s32.totalorder %s8, 1
    %p102 = por %p100, %p101
    %p103 = scmp.ne.s32.totalorder %s95, %s98
    %p104 = scmp.eq.s32.totalorder %s8, 0
    %p105 = por %p103, %p104
    %p106 = scmp.ne.s32.totalorder %s95, %s98
    %p107 = scmp.eq.s32.totalorder %s13, 1
    %p108 = por %p106, %p107
    %p109 = scmp.ne.s32.totalorder %s98, %s99
    %p110 = scmp.eq.s32.totalorder %s13, 0
    %p111 = por %p109, %p110
    %p112 = scmp.ne.s32.totalorder %s98, %s99
    %p113 = scmp.eq.s32.totalorder %s14, 1
    %p114 = por %p112, %p113
    %p116 = scmp.ne.s32.totalorder %s99, %s115
    %p117 = scmp.eq.s32.totalorder %s14, 0
    %p118 = por %p116, %p117
    %p119 = scmp.le.s32.totalorder 1, %s8
    %p120 = scmp.lt.s32.totalorder %s8, 3
    %p121 = pnand %p119, %p120
    %p122 = pneg %p121
    // Predicated region
    $region9: #{fully_connected_entity_layer.1} parent=5 // pred_check
      _
    $region10: #{fully_connected_entity_layer.1} parent=5 // pred_check_branch
      %124 = sbr.rel (%p121) target = $region12
    $region11: #{fully_connected_entity_layer.1} parent=5 // pred_region
      %s125 = ssub.s32 %s8, 1
      // Predicated region
      $region13: #{fully_connected_entity_layer.1} parent=11 // pred_check
        %p126 = pneg %p83
      $region14: #{fully_connected_entity_layer.1} parent=11 // pred_check_branch
        %128 = sbr.rel (%p126) target = $region16
      $region15: #{fully_connected_entity_layer.1} parent=11 // pred_region
        %s129 = smul.u32 4, %s20
        %p130 = scmp.lt.s32.totalorder %s129, 3
        %s131 = scalar_select %p130, %s129, 3
        %p132 = scmp.lt.s32.totalorder %s19, 0
        %s133 = scalar_select %p132, %s19, 0
        %s134 = sadd.s32 %s133, %s131
        %s135 = smul.addr %s134, 4
        %s136 = scalar_lea.vmem %s1, %s135
        %s137 = smul.u32 4, %s20
      $region16: #{fully_connected_entity_layer.1} parent=11 // pred_fallthru
        _
    $region12: #{fully_connected_entity_layer.1} parent=5 // pred_fallthru
      _
    %p138 = scmp.lt.s32.totalorder %s8, 2
    // Predicated region
    $region17: #{fully_connected_entity_layer.1} parent=5 // pred_check
      %p139 = pneg %p138
    $region18: #{fully_connected_entity_layer.1} parent=5 // pred_check_branch
      %141 = sbr.rel (%p139) target = $region20
    $region19: #{fully_connected_entity_layer.1} parent=5 // pred_region
      // Predicated region
      $region21: #{fully_connected_entity_layer.1} parent=19 // pred_check
        %p142 = pneg %p49
      $region22: #{fully_connected_entity_layer.1} parent=19 // pred_check_branch
        %144 = sbr.rel (%p142) target = $region24
      $region23: #{fully_connected_entity_layer.1} parent=19 // pred_region
        %p145 = scmp.lt.s32.totalorder %s15, 1
        %s146 = scalar_select %p145, %s15, 1
        %p147 = scmp.lt.s32.totalorder %s17, 0
        %s148 = scalar_select %p147, %s17, 0
        %s149 = sadd.s32 %s148, %s146
        %s150 = smul.addr %s149, 8
        %s151 = scalar_lea.vmem %s0, %s150
      $region24: #{fully_connected_entity_layer.1} parent=19 // pred_fallthru
        _
    $region20: #{fully_connected_entity_layer.1} parent=5 // pred_fallthru
      _
    %p152 = scmp.le.s32.totalorder 1, %s8
    %p153 = scmp.lt.s32.totalorder %s8, 3
    %p154 = pnand %p152, %p153
    %p155 = pneg %p154
    // Predicated region
    $region25: #{fully_connected_entity_layer.1} parent=5 // pred_check
      _
    $region26: #{fully_connected_entity_layer.1} parent=5 // pred_check_branch
      %157 = sbr.rel (%p154) target = $region28
    $region27: #{fully_connected_entity_layer.1} parent=5 // pred_region
      %s158 = ssub.s32 %s8, 1
      %p159 = scmp.lt.s32.totalorder %s18, 1
      %s160 = scalar_select %p159, %s18, 1
      %p161 = scmp.lt.s32.totalorder %s20, 0
      %s162 = scalar_select %p161, %s20, 0
      %s163 = sadd.s32 %s162, %s160
      %s164 = smul.addr %s163, 8
      %s165 = scalar_lea.vmem %s0, %s164
      %p166 = pneg %p55
      %p167 = pneg %p52
      %s168 = smul.u32 4, %s20
      %p169 = scmp.lt.s32.totalorder %s168, 3
      %s170 = scalar_select %p169, %s168, 3
      %p171 = scmp.lt.s32.totalorder %s19, 0
      %s172 = scalar_select %p171, %s19, 0
      %s173 = sadd.s32 %s172, %s170
      %s174 = smul.addr %s173, 4
      %s175 = scalar_lea.vmem %s1, %s174
      %p176 = pneg %p83
      %p177 = pneg %p80
      %p178 = pneg %p111
      %p179 = pneg %p108
      %p180 = scmp.lt.s32.totalorder %s18, 1
      %s181 = scalar_select %p180, %s18, 1
      %p182 = scmp.lt.s32.totalorder %s19, 0
      %s183 = scalar_select %p182, %s19, 0
      %s184 = sadd.s32 %s183, %s181
      %s185 = smul.addr %s184, 8
      %s186 = scalar_lea.vmem %s2, %s185
      %p187 = scmp.lt.s32.totalorder %s18, 1
      %s188 = scalar_select %p187, %s18, 1
      %p189 = scmp.lt.s32.totalorder %s20, 0
      %s190 = scalar_select %p189, %s20, 0
      %s191 = sadd.s32 %s190, %s188
      %s192 = smul.addr %s191, 8
      %s193 = scalar_lea.vmem %s0, %s192
      %s194 = smul.u32 4, %s20
      %p195 = scmp.lt.s32.totalorder %s194, 3
      %s196 = scalar_select %p195, %s194, 3
      %p197 = scmp.lt.s32.totalorder %s19, 0
      %s198 = scalar_select %p197, %s19, 0
      %s199 = sadd.s32 %s198, %s196
      %s200 = smul.addr %s199, 4
      %s201 = scalar_lea.vmem %s1, %s200
      %s202 = smul.u32 4, %s20
      %p203 = scmp.lt.s32.totalorder %s18, 1
      %s204 = scalar_select %p203, %s18, 1
      %p205 = scmp.lt.s32.totalorder %s19, 0
      %s206 = scalar_select %p205, %s19, 0
      %s207 = sadd.s32 %s206, %s204
      %s208 = smul.addr %s207, 8
      %s209 = scalar_lea.vmem %s2, %s208
      %v211 = vld [vmem:[%s193] sm:$0xff]
      %v212 = vtanh.pop %v211
      %v213 = vpack.c.bf16 %v212, %v212
      %v214 = vld [vmem:[%s201] sm:$0xf]
      %v215 = vld [vmem:[%s201 + $0x4] sm:$0xf]
      %v216 = vld [vmem:[%s201 + $0x8] sm:$0xf]
      %v217 = vld [vmem:[%s201 + $0xc] sm:$0xf]
      %v222 = vunpack.c.l.b16 %v214
      %v223 = vunpack.c.l.b16 %v215
      %v224 = vunpack.c.l.b16 %v216
      %v225 = vunpack.c.l.b16 %v217
      %v226 = vpack.c.b16 %v223, %v222
      %v227 = vpack.c.b16 %v225, %v224
      %vm230 = vcmask 261120
      %v232 = vsel %vm230, %v213, 0
      %234 = vmatpush.bf16.msra.mxu0 0
      %235 = vmatpush.bf16.msra.mxu0 0
      %236 = vmatpush.bf16.msra.mxu0 0
      %237 = vmatpush.bf16.msra.mxu0 0
      %238 = vmatpush.bf16.msra.mxu0 0
      %239 = vmatpush.bf16.msra.mxu0 0
      %240 = vmatpush.bf16.msra.mxu0 %v227
      %241 = vmatpush.bf16.msra.mxu0 %v226
      %242 = vmatmul.bf16.gmra.mxu0 %v232
      %v243 = vpop.f32.mrf.mxu0
      %v244 = vadd.f32 0.0, %v243
      %v245 = vpop.f32.mrf.mxu0
      %246 = vdwg.mxu0
      %247 = vst [vmem:[%s209] sm:$0xff] %v244
      %p248 = scmp.lt.s32.totalorder %s18, 1
      %s249 = scalar_select %p248, %s18, 1
      %p250 = scmp.lt.s32.totalorder %s19, 0
      %s251 = scalar_select %p250, %s19, 0
      %s252 = sadd.s32 %s251, %s249
      %s253 = smul.addr %s252, 8
      %s254 = scalar_lea.vmem %s2, %s253
      // Predicated region
      $region29: #{fully_connected_entity_layer.1} parent=27 // pred_check
        %p255 = pneg %p108
      $region30: #{fully_connected_entity_layer.1} parent=27 // pred_check_branch
        %257 = sbr.rel (%p255) target = $region32
      $region31: #{fully_connected_entity_layer.1} parent=27 // pred_region
        _
      $region32: #{fully_connected_entity_layer.1} parent=27 // pred_fallthru
        _
    $region28: #{fully_connected_entity_layer.1} parent=5 // pred_fallthru
      _
    %p258 = scmp.le.s32.totalorder 2, %s8
    // Predicated region
    $region33: #{fully_connected_entity_layer.1} parent=5 // pred_check
      %p259 = pneg %p258
    $region34: #{fully_connected_entity_layer.1} parent=5 // pred_check_branch
      %261 = sbr.rel (%p259) target = $region36
    $region35: #{fully_connected_entity_layer.1} parent=5 // pred_region
      %s262 = ssub.s32 %s8, 2
      // Predicated region
      $region37: #{fully_connected_entity_layer.1} parent=35 // pred_check
        %p263 = pneg %p114
      $region38: #{fully_connected_entity_layer.1} parent=35 // pred_check_branch
        %265 = sbr.rel (%p263) target = $region40
      $region39: #{fully_connected_entity_layer.1} parent=35 // pred_region
        %p266 = scmp.lt.s32.totalorder %s21, 1
        %s267 = scalar_select %p266, %s21, 1
        %p268 = scmp.lt.s32.totalorder %s22, 0
        %s269 = scalar_select %p268, %s22, 0
        %s270 = sadd.s32 %s269, %s267
        %s271 = smul.addr %s270, 8
        %s272 = scalar_lea.vmem %s2, %s271
      $region40: #{fully_connected_entity_layer.1} parent=35 // pred_fallthru
        _
    $region36: #{fully_connected_entity_layer.1} parent=5 // pred_fallthru
      _
  $region6: #{fully_connected_entity_layer.1} parent=0 // loop_footer
    %s12 = sadd.s32 1, %s8
  $region7: #{fully_connected_entity_layer.1} parent=0 // loop_footer_branch
    %7 = sbr.rel target = $region3
  $region8: #{fully_connected_entity_layer.1} parent=0 // loop_exit
    _

</llo_original>
